<compile_context>
chip_gen: v6e
topology: v6e:2x2x1
jax: 0.10.0
libtpu: 0.0.40
codegen_flags: <defaults>
</compile_context>

<pallas_src>
import numpy as np
import jax
import jax.numpy as jnp
from jax.experimental import pallas as pl
from jax.experimental.pallas import tpu as pltpu


def inception_pool_kernel(x_ref, pw_ref, o_ref, acc_ref):
    # x_ref: (tile_nc, D, tile_hw)  pw_ref: (D, 6)  o_ref: (tile_nc, 6)
    # acc_ref: (tile_nc, D) f32 scratch, resident across the HW reduction axis.
    j = pl.program_id(1)

    @pl.when(j == 0)
    def _():
        acc_ref[...] = jnp.zeros_like(acc_ref)

    # Partial spatial sum, accumulated in f32.
    acc_ref[...] += jnp.sum(x_ref[...], axis=-1, dtype=jnp.float32)

    @pl.when(j == pl.num_programs(1) - 1)
    def _():
        # Depth pooling for all 6 adaptive bins as one small matmul; the
        # 1/(H*W*bin_size) normalization is baked into pw.
        o_ref[...] = jnp.dot(
            acc_ref[...], pw_ref[...], preferred_element_type=jnp.float32
        ).astype(o_ref.dtype)


def _pool_weights(D, HW):
    """(D, 6) f32 weights: column c averages depth bin c of pools k=1,2,3,
    with the 1/(H*W) spatial-mean factor folded in (PyTorch floor/ceil bin edges)."""
    w = np.zeros((D, 6), dtype=np.float32)
    col = 0
    for k in (1, 2, 3):
        for i in range(k):
            s = (i * D) // k
            e = -((-(i + 1) * D) // k)  # ceil division
            w[s:e, col] = 1.0 / (HW * (e - s))
            col += 1
    return jnp.asarray(w)


def _chip_config():
    """Per-generation (target_block_bytes, vmem_limit_bytes)."""
    try:
        vmem_cap = int(getattr(pltpu.get_tpu_info(), "vmem_capacity_bytes", 128 << 20))
    except Exception:  # pragma: no cover - conservative fallback
        vmem_cap = 64 << 20
    if vmem_cap <= 80 << 20:
        # v7x-class: only 64 MiB physical VMEM, 2 TensorCores/chip.
        return 8 << 20, 44 << 20
    # v5e / v6e: 128 MiB physical VMEM (v5e scoped default is just 16 MiB,
    # so the explicit limit is what allows large blocks there).
    return 8 << 20, 64 << 20


def _round_down8(v):
    return max(8, (v // 8) * 8)


def _choose_tiles(NC, D, HW, itemsize, target_block_bytes):
    """Return (tile_nc, tile_hw, hw_pad)."""
    # Prefer the full HW extent: contiguous DMA, 1-step reduction.
    if 8 * D * HW * itemsize <= target_block_bytes or HW <= 128:
        tile_hw, hw_pad = HW, 0
    else:
        # Must split HW: largest multiple of 128 keeping an (8, D, tile_hw)
        # block within budget; prefer an exact divisor of HW, else zero-pad.
        max_hw = max(128, (target_block_bytes // (8 * D * itemsize)) // 128 * 128)
        tile_hw = None
        for cand in range(min(max_hw, (HW // 128) * 128), 0, -128):
            if HW % cand == 0:
                tile_hw = cand
                break
        if tile_hw is None:
            tile_hw = min(max_hw, -(-HW // 128) * 128)
        if tile_hw >= HW:
            tile_hw, hw_pad = HW, 0
        else:
            hw_pad = (-HW) % tile_hw

    if NC < 8:
        tile_nc = NC  # full extent: always a legal block shape
    else:
        max_nc = _round_down8(
            max(8, target_block_bytes // max(1, D * tile_hw * itemsize))
        )
        tile_nc = min(max_nc, _round_down8(NC))
        if NC >= 16:
            # >= 2 steps on the parallel axis so both v7x TensorCores get work.
            tile_nc = min(tile_nc, _round_down8(NC // 2))
    return tile_nc, tile_hw, hw_pad


def inception_pool(x, *, target_block_bytes=None, vmem_limit_bytes=None):
    """x: (N, C, D, H, W) array (NCDHW, as in PyTorch). Returns (N, C, 6, 1, 1)."""
    N, C, D, H, W = x.shape
    NC, HW = N * C, H * W
    itemsize = jnp.dtype(x.dtype).itemsize

    cfg_block, cfg_vmem = _chip_config()
    target_block_bytes = cfg_block if target_block_bytes is None else target_block_bytes
    vmem_limit_bytes = cfg_vmem if vmem_limit_bytes is None else vmem_limit_bytes

    tile_nc, tile_hw, hw_pad = _choose_tiles(NC, D, HW, itemsize, target_block_bytes)

    xr = x.reshape(NC, D, HW)
    if hw_pad:
        # Zeros do not perturb the spatial sum; normalization uses the true HW.
        xr = jnp.pad(xr, ((0, 0), (0, 0), (0, hw_pad)))

    grid_nc = pl.cdiv(NC, tile_nc)
    grid_hw = (HW + hw_pad) // tile_hw
    nc_padded = grid_nc * tile_nc  # rows past NC are garbage and sliced off below

    pw = _pool_weights(D, HW)

    x_spec_kwargs = {}
    if grid_hw > 1:
        # Small strided blocks expose DMA issue latency; deepen the pipeline.
        x_spec_kwargs["pipeline_mode"] = pl.Buffered(3)

    out = pl.pallas_call(
        inception_pool_kernel,
        out_shape=jax.ShapeDtypeStruct((nc_padded, 6), x.dtype),
        grid_spec=pltpu.PrefetchScalarGridSpec(
            num_scalar_prefetch=0,
            grid=(grid_nc, grid_hw),
            in_specs=[
                pl.BlockSpec(
                    (tile_nc, D, tile_hw), lambda i, j: (i, 0, j), **x_spec_kwargs
                ),
                pl.BlockSpec((D, 6), lambda i, j: (0, 0)),
            ],
            out_specs=pl.BlockSpec((tile_nc, 6), lambda i, j: (i, 0)),
            scratch_shapes=[pltpu.VMEM((tile_nc, D), jnp.float32)],
        ),
        compiler_params=pltpu.CompilerParams(
            dimension_semantics=("parallel", "arbitrary"),
            vmem_limit_bytes=vmem_limit_bytes,
        ),
        cost_estimate=pl.CostEstimate(
            flops=NC * D * (HW + 12),
            transcendentals=0,
            bytes_accessed=NC * D * (HW + hw_pad) * itemsize + NC * 6 * itemsize,
        ),
    )(xr, pw)
    return out[:NC].reshape(N, C, 6, 1, 1)


def _reference(x):
    # Pure-JAX reference of AdaptiveAvgPool3d((k,1,1)) for k=1,2,3 + concat on depth.
    N, C, D, H, W = x.shape
    dm = jnp.mean(x.astype(jnp.float32), axis=(3, 4))  # (N, C, D)
    cols = []
    for k in (1, 2, 3):
        for i in range(k):
            s = (i * D) // k
            e = -((-(i + 1) * D) // k)
            cols.append(jnp.mean(dm[:, :, s:e], axis=-1))
    out = jnp.stack(cols, axis=-1)  # (N, C, 6)
    return out.reshape(N, C, 6, 1, 1).astype(x.dtype)


def _check(x, name, **kwargs):
    out = jax.block_until_ready(inception_pool(x, **kwargs))
    ref = jax.block_until_ready(_reference(x))
    N, C = x.shape[:2]
    assert out.shape == (N, C, 6, 1, 1), (name, out.shape)
    assert jnp.allclose(out, ref, atol=1e-5, rtol=1e-5), f"mismatch vs reference ({name})"


if __name__ == "__main__":
    key = jax.random.PRNGKey(0)

    # Test 1: base shape — full-HW contiguous path, 1x1 grid.
    x1 = jax.random.normal(key, (2, 4, 8, 16, 16), dtype=jnp.float32)
    _check(x1, "base")

    # Test 2: odd depth and NC=15 (not a multiple of 8) — exercises the cdiv NC
    # grid with a trailing partial block (padded output rows sliced off).
    x2 = jax.random.normal(jax.random.PRNGKey(1), (3, 5, 7, 20, 24), dtype=jnp.float32)
    _check(x2, "cdiv_nc")

    # Test 3: force the HW-split path (tiny block budget) — multi-step
    # accumulator reduction with pl.Buffered(3) on the x BlockSpec.
    x3 = jax.random.normal(jax.random.PRNGKey(2), (2, 4, 7, 48, 48), dtype=jnp.float32)
    _check(x3, "hw_split", target_block_bytes=64 << 10)

    # Test 4: HW split where no multiple-of-128 divisor exists — exercises the
    # zero-padded HW path (normalization uses the true H*W).
    x4 = jax.random.normal(jax.random.PRNGKey(3), (2, 4, 7, 45, 45), dtype=jnp.float32)
    _check(x4, "hw_pad", target_block_bytes=64 << 10)

    print("KERNEL_OK")
</pallas_src>

<mosaic_0001>
module attributes {stable_mosaic.version = 11 : i64} {
  func.func @inception_pool_kernel(%arg0: i32, %arg1: i32, %arg2: memref<8x8x256xf32, #tpu.memory_space<vmem>>, %arg3: memref<8x6xf32, #tpu.memory_space<vmem>>, %arg4: memref<8x6xf32, #tpu.memory_space<vmem>>, %arg5: memref<8x8xf32, #tpu.memory_space<vmem>>) attributes {dimension_semantics = [#tpu.dimension_semantics<parallel>, #tpu.dimension_semantics<arbitrary>], iteration_bounds = array<i64: 1, 1>, scalar_prefetch = 0 : i64, scratch_operands = 1 : i64, tpu.core_type = #tpu.core_type<tc>, window_params = [{transform_indices = @transform_0, window_bounds = array<i64: 8, 8, 256>}, {pipeline_mode = #tpu.pipeline_mode<synchronous>, transform_indices = @transform_1, window_bounds = array<i64: 8, 6>}, {transform_indices = @transform_2, window_bounds = array<i64: 8, 6>}]} {
    %c0_i32 = arith.constant 0 : i32
    %0 = arith.cmpi eq, %arg1, %c0_i32 : i32
    %1 = arith.extui %0 : i1 to i32
    %c0_i32_0 = arith.constant 0 : i32
    %2 = arith.cmpi ne, %1, %c0_i32_0 : i32
    scf.if %2 {
      %cst_9 = arith.constant 0.000000e+00 : f32
      %11 = vector.broadcast %cst_9 : f32 to vector<8x8xf32>
      %c0_10 = arith.constant 0 : index
      %c0_11 = arith.constant 0 : index
      %12 = vector.load %arg5[%c0_10, %c0_11] : memref<8x8xf32, #tpu.memory_space<vmem>>, vector<8x8xf32>
      tpu.vector_store %arg5[%c0_10, %c0_11], %11 {strides = array<i32>} : memref<8x8xf32, #tpu.memory_space<vmem>>, vector<8x8xf32>,
    } else {
    }
    %c0 = arith.constant 0 : index
    %c0_1 = arith.constant 0 : index
    %3 = vector.load %arg5[%c0, %c0_1] : memref<8x8xf32, #tpu.memory_space<vmem>>, vector<8x8xf32>
    %c0_2 = arith.constant 0 : index
    %c0_3 = arith.constant 0 : index
    %c0_4 = arith.constant 0 : index
    %4 = vector.load %arg2[%c0_2, %c0_3, %c0_4] : memref<8x8x256xf32, #tpu.memory_space<vmem>>, vector<8x8x256xf32>
    %cst = arith.constant dense<0.000000e+00> : vector<8x8xf32>
    %5 = vector.multi_reduction <add>, %4, %cst [2] : vector<8x8x256xf32> to vector<8x8xf32>
    %6 = arith.addf %3, %5 : vector<8x8xf32>
    %c0_5 = arith.constant 0 : index
    %c0_6 = arith.constant 0 : index
    %7 = vector.load %arg5[%c0_5, %c0_6] : memref<8x8xf32, #tpu.memory_space<vmem>>, vector<8x8xf32>
    tpu.vector_store %arg5[%c0_5, %c0_6], %6 {strides = array<i32>} : memref<8x8xf32, #tpu.memory_space<vmem>>, vector<8x8xf32>,
    %c0_i32_7 = arith.constant 0 : i32
    %8 = arith.cmpi eq, %arg1, %c0_i32_7 : i32
    %9 = arith.extui %8 : i1 to i32
    %c0_i32_8 = arith.constant 0 : i32
    %10 = arith.cmpi ne, %9, %c0_i32_8 : i32
    scf.if %10 {
      %c0_9 = arith.constant 0 : index
      %c0_10 = arith.constant 0 : index
      %11 = vector.load %arg5[%c0_9, %c0_10] : memref<8x8xf32, #tpu.memory_space<vmem>>, vector<8x8xf32>
      %c0_11 = arith.constant 0 : index
      %c0_12 = arith.constant 0 : index
      %12 = vector.load %arg3[%c0_11, %c0_12] : memref<8x6xf32, #tpu.memory_space<vmem>>, vector<8x6xf32>
      %cst_13 = arith.constant dense<0.000000e+00> : vector<8x6xf32>
      %13 = tpu.matmul %11, %12, %cst_13 {dimension_numbers = #tpu.dot_dimension_numbers<[1], [0], [0], [1], [0, 0, 1, 1], [], []>} : vector<8x8xf32>, vector<8x6xf32>, vector<8x6xf32> -> vector<8x6xf32>
      %c0_14 = arith.constant 0 : index
      %c0_15 = arith.constant 0 : index
      %14 = vector.load %arg4[%c0_14, %c0_15] : memref<8x6xf32, #tpu.memory_space<vmem>>, vector<8x6xf32>
      tpu.vector_store %arg4[%c0_14, %c0_15], %13 {strides = array<i32>} : memref<8x6xf32, #tpu.memory_space<vmem>>, vector<8x6xf32>,
    } else {
    }
    return
  }
  func.func @transform_0(%arg0: i32, %arg1: i32) -> (i32, i32, i32) {
    %c0_i32 = arith.constant 0 : i32
    %c0_i32_0 = arith.constant 0 : i32
    return %arg0, %c0_i32, %arg1 : i32, i32, i32
  }
  func.func @transform_1(%arg0: i32, %arg1: i32) -> (i32, i32) {
    %c0_i32 = arith.constant 0 : i32
    %c0_i32_0 = arith.constant 0 : i32
    %c0_i32_1 = arith.constant 0 : i32
    return %c0_i32, %c0_i32_0 : i32, i32
  }
  func.func @transform_2(%arg0: i32, %arg1: i32) -> (i32, i32) {
    %c0_i32 = arith.constant 0 : i32
    %c0_i32_0 = arith.constant 0 : i32
    return %arg0, %c0_i32 : i32, i32
  }
}

</mosaic_0001>

<llo_original>
// kernel: tpu_custom_call.1
$region0: #{tpu_custom_call.1}
  #allocation0 [shape = 'u32[]', space=smem, size = 0x4, offset = 0x4, fixed_abs, tag = 'smem constant byte address 0x4 - core index']
  #allocation1 [shape = 'u32[144,128]{1,0:T(1,128)}', space=vmem, size = 0x12000, scoped, tag = 'internal scratch']
  #allocation2 [shape = 'f32[8,8]{1,0:T(8,128)}', space=vmem, size = 0x1000, scoped, tag = 'scratch operand']
  %s0 = inlined_call_operand.hbm [shape: f32[8,8,256], index: 0, kind: input, shape index: {}]
  %s1 = inlined_call_operand.hbm [shape: f32[8,6], index: 1, kind: input, shape index: {}]
  %s2 = inlined_call_operand.hbm [shape: f32[8,6], index: 2, kind: output, shape index: {}]
  %s3 = sld [smem:[#allocation0]]
  $region34: #{tpu_custom_call.1} parent=0
    _
  %s5 = ssub.s32 1, %s3
  %s6 = scalar_select 0, %s5, %s3
  $region1: #{tpu_custom_call.1} parent=0
    #allocation3 [shape = 'u8[65536]{0}', space=vmem, size = 0x10000, scoped, tag = 'input window, operand 0, single buffered']
    #allocation4 [shape = 's32[1]{0}', space=sflag, size = 0x4, scoped, tag = 'scoped memory for tpu_custom_call.1']
    #allocation5 [shape = 's32[1]{0}', space=sflag, size = 0x4, scoped, tag = 'scoped memory for tpu_custom_call.1']
    #allocation6 [shape = 'u8[4096]{0}', space=vmem, size = 0x1000, scoped, tag = 'input window, operand 1, single buffered']
    #allocation7 [shape = 's32[1]{0}', space=sflag, size = 0x4, scoped, tag = 'scoped memory for tpu_custom_call.1']
    #allocation8 [shape = 'u8[4096]{0}', space=vmem, size = 0x1000, scoped, tag = 'output window, operand 0, single buffered']
    %7 = vsyncpa [#allocation4], 0
    %8 = vsyncpa [#allocation7], 0
    %9 = vsyncpa [#allocation5], 0
    // Predicated region
    $region2: #{tpu_custom_call.1} parent=1 // pred_check
      _
    $region3: #{tpu_custom_call.1} parent=1 // pred_check_branch
      %11 = sbr.rel (0) target = $region5
    $region4: #{tpu_custom_call.1} parent=1 // pred_region
      %s13 = ssub.s32 2048, 2048
      %14 = vsyncadd [#allocation4], %s13
      %s15 = sshll.u32 [#allocation3], 4
      %s16 = int_to_ptr.vmem [resolvable:$true] %s15
      %21 = dma.hbm_to_vmem [thread:$0]  %s0, 2048, %s16, [#allocation4], 256, 256, 16
    $region5: #{tpu_custom_call.1} parent=1 // pred_fallthru
      _
    // Predicated region
    $region6: #{tpu_custom_call.1} parent=1 // pred_check
      _
    $region7: #{tpu_custom_call.1} parent=1 // pred_check_branch
      %23 = sbr.rel (0) target = $region9
    $region8: #{tpu_custom_call.1} parent=1 // pred_region
      %s25 = ssub.s32 128, 128
      %26 = vsyncadd [#allocation7], %s25
      %s28 = sshll.u32 [#allocation6], 4
      %s29 = int_to_ptr.vmem [resolvable:$true] %s28
      %31 = dma.hbm_to_vmem [thread:$0]  %s1, 128, %s29, [#allocation7]
    $region9: #{tpu_custom_call.1} parent=1 // pred_fallthru
      _
    // Predicated region
    $region10: #{tpu_custom_call.1} parent=1 // pred_check
      _
    $region11: #{tpu_custom_call.1} parent=1 // pred_check_branch
      %33 = sbr.rel (0) target = $region13
    $region12: #{tpu_custom_call.1} parent=1 // pred_region
      %34 = dma.done [#allocation4], 2048
    $region13: #{tpu_custom_call.1} parent=1 // pred_fallthru
      _
    // Predicated region
    $region14: #{tpu_custom_call.1} parent=1 // pred_check
      _
    $region15: #{tpu_custom_call.1} parent=1 // pred_check_branch
      %36 = sbr.rel (0) target = $region17
    $region16: #{tpu_custom_call.1} parent=1 // pred_region
      %37 = dma.done [#allocation7], 128
    $region17: #{tpu_custom_call.1} parent=1 // pred_fallthru
      _
    %p38 = scmp.eq.s32.totalorder 0, 0
    // Predicated region
    $region18: #{tpu_custom_call.1} parent=1 // pred_check
      %p39 = pneg %p38
    $region19: #{tpu_custom_call.1} parent=1 // pred_check_branch
      %41 = sbr.rel (%p39) target = $region21
    $region20: #{tpu_custom_call.1} parent=1 // pred_region
      %vm42 = vcmask 64512
      %43 = vst.msk [vmem:[#allocation2] sm:$0xff] %vm42, 0.0
    $region21: #{tpu_custom_call.1} parent=1 // pred_fallthru
      _
    %v44 = vld [vmem:[#allocation2] sm:$0xff]
    %v45 = vld [vmem:[#allocation3] sm:$0xff]
    %v46 = vld [vmem:[#allocation3 + $0x8] sm:$0xff]
    %v47 = vld [vmem:[#allocation3 + $0x10] sm:$0xff]
    %v48 = vld [vmem:[#allocation3 + $0x18] sm:$0xff]
    %v49 = vld [vmem:[#allocation3 + $0x20] sm:$0xff]
    %v50 = vld [vmem:[#allocation3 + $0x28] sm:$0xff]
    %v51 = vld [vmem:[#allocation3 + $0x30] sm:$0xff]
    %v52 = vld [vmem:[#allocation3 + $0x38] sm:$0xff]
    %v53 = vld [vmem:[#allocation3 + $0x40] sm:$0xff]
    %v54 = vld [vmem:[#allocation3 + $0x48] sm:$0xff]
    %v55 = vld [vmem:[#allocation3 + $0x50] sm:$0xff]
    %v56 = vld [vmem:[#allocation3 + $0x58] sm:$0xff]
    %v57 = vld [vmem:[#allocation3 + $0x60] sm:$0xff]
    %v58 = vld [vmem:[#allocation3 + $0x68] sm:$0xff]
    %v59 = vld [vmem:[#allocation3 + $0x70] sm:$0xff]
    %v60 = vld [vmem:[#allocation3 + $0x78] sm:$0xff]
    %v61 = vadd.f32 %v45, %v46
    %62 = vadd.xlane.f32.xlu0 %v61
    %v63 = vpop.xlane.xlu0 %62
    %v64 = vadd.f32 %v47, %v48
    %65 = vadd.xlane.f32.xlu0 %v64
    %v66 = vpop.xlane.xlu0 %65
    %v67 = vadd.f32 %v49, %v50
    %68 = vadd.xlane.f32.xlu0 %v67
    %v69 = vpop.xlane.xlu0 %68
    %v70 = vadd.f32 %v51, %v52
    %71 = vadd.xlane.f32.xlu0 %v70
    %v72 = vpop.xlane.xlu0 %71
    %v73 = vadd.f32 %v53, %v54
    %74 = vadd.xlane.f32.xlu0 %v73
    %v75 = vpop.xlane.xlu0 %74
    %v76 = vadd.f32 %v55, %v56
    %77 = vadd.xlane.f32.xlu0 %v76
    %v78 = vpop.xlane.xlu0 %77
    %v79 = vadd.f32 %v57, %v58
    %80 = vadd.xlane.f32.xlu0 %v79
    %v81 = vpop.xlane.xlu0 %80
    %v82 = vadd.f32 %v59, %v60
    %83 = vadd.xlane.f32.xlu0 %v82
    %v84 = vpop.xlane.xlu0 %83
    %v93 = vlaneseq
    %v94 = vand.u32 %v93, 127
    %v95 = vlaneseq
    %v96 = vshrl.u32 %v95, 7
    %v97 = vsub.s32 %v94, %v96
    %v98 = vrot.slane %v63, %v97
    %v99 = vlaneseq
    %v100 = vshrl.u32 %v99, 7
    %v101 = vsub.s32 %v94, %v100
    %v102 = vrot.slane %v66, %v101
    %v103 = vlaneseq
    %v104 = vshrl.u32 %v103, 7
    %v105 = vsub.s32 %v94, %v104
    %v106 = vrot.slane %v69, %v105
    %v107 = vlaneseq
    %v108 = vshrl.u32 %v107, 7
    %v109 = vsub.s32 %v94, %v108
    %v110 = vrot.slane %v72, %v109
    %v111 = vlaneseq
    %v112 = vshrl.u32 %v111, 7
    %v113 = vsub.s32 %v94, %v112
    %v114 = vrot.slane %v75, %v113
    %v115 = vlaneseq
    %v116 = vshrl.u32 %v115, 7
    %v117 = vsub.s32 %v94, %v116
    %v118 = vrot.slane %v78, %v117
    %v119 = vlaneseq
    %v120 = vshrl.u32 %v119, 7
    %v121 = vsub.s32 %v94, %v120
    %v122 = vrot.slane %v81, %v121
    %v123 = vlaneseq
    %v124 = vshrl.u32 %v123, 7
    %v125 = vsub.s32 %v94, %v124
    %v126 = vrot.slane %v84, %v125
    %vm127 = vcmask 1041409
    %v128 = vsel %vm127, %v102, %v98
    %vm129 = vcmask 1042434
    %v130 = vsel %vm129, %v106, %v128
    %vm131 = vcmask 1043459
    %v132 = vsel %vm131, %v110, %v130
    %vm133 = vcmask 1044484
    %v134 = vsel %vm133, %v114, %v132
    %vm135 = vcmask 1045509
    %v136 = vsel %vm135, %v118, %v134
    %vm137 = vcmask 1046534
    %v138 = vsel %vm137, %v122, %v136
    %vm139 = vcmask 1047559
    %v140 = vsel %vm139, %v126, %v138
    %v142 = vadd.f32 %v44, %v140
    %vm143 = vcmask 64512
    %144 = vst.msk [vmem:[#allocation2] sm:$0xff] %vm143, %v142
    // Predicated region
    $region22: #{tpu_custom_call.1} parent=1 // pred_check
      %p145 = pneg %p38
    $region23: #{tpu_custom_call.1} parent=1 // pred_check_branch
      %147 = sbr.rel (%p145) target = $region25
    $region24: #{tpu_custom_call.1} parent=1 // pred_region
      %v148 = vld [vmem:[#allocation2] sm:$0xff]
      %v149 = vld [vmem:[#allocation6] sm:$0xff]
      %v151 = vsel %vm143, %v148, 0
      %153 = vmatprep.subr.mxu0 0.0
      %154 = vmatpush1.msra.mxu0 0.0
      %155 = vmatprep.subr.mxu0 0.0
      %156 = vmatpush1.msra.mxu0 0.0
      %157 = vmatprep.subr.mxu0 0.0
      %158 = vmatpush1.msra.mxu0 0.0
      %159 = vmatprep.subr.mxu0 0.0
      %160 = vmatpush1.msra.mxu0 0.0
      %161 = vmatprep.subr.mxu0 0.0
      %162 = vmatpush1.msra.mxu0 0.0
      %163 = vmatprep.subr.mxu0 0.0
      %164 = vmatpush1.msra.mxu0 0.0
      %165 = vmatprep.subr.mxu0 0.0
      %166 = vmatpush1.msra.mxu0 0.0
      %167 = vmatprep.subr.mxu0 0.0
      %168 = vmatpush1.msra.mxu0 0.0
      %169 = vmatprep.subr.mxu0 0.0
      %170 = vmatpush1.msra.mxu0 0.0
      %171 = vmatprep.subr.mxu0 0.0
      %172 = vmatpush1.msra.mxu0 0.0
      %173 = vmatprep.subr.mxu0 0.0
      %174 = vmatpush1.msra.mxu0 0.0
      %175 = vmatprep.subr.mxu0 0.0
      %176 = vmatpush1.msra.mxu0 0.0
      %177 = vmatprep.subr.mxu0 0.0
      %178 = vmatpush1.msra.mxu0 0.0
      %179 = vmatprep.subr.mxu0 0.0
      %180 = vmatpush1.msra.mxu0 0.0
      %181 = vmatprep.subr.mxu0 0.0
      %182 = vmatpush1.msra.mxu0 0.0
      %183 = vmatprep.subr.mxu0 0.0
      %184 = vmatpush1.msra.mxu0 %v149
      %185 = vmatprep.subr.mxu0 0.0
      %186 = vmatpush2.msra.mxu0 0.0
      %187 = vmatprep.subr.mxu0 0.0
      %188 = vmatpush2.msra.mxu0 0.0
      %189 = vmatprep.subr.mxu0 0.0
      %190 = vmatpush2.msra.mxu0 0.0
      %191 = vmatprep.subr.mxu0 0.0
      %192 = vmatpush2.msra.mxu0 0.0
      %193 = vmatprep.subr.mxu0 0.0
      %194 = vmatpush2.msra.mxu0 0.0
      %195 = vmatprep.subr.mxu0 0.0
      %196 = vmatpush2.msra.mxu0 0.0
      %197 = vmatprep.subr.mxu0 0.0
      %198 = vmatpush2.msra.mxu0 0.0
      %199 = vmatprep.subr.mxu0 0.0
      %200 = vmatpush2.msra.mxu0 0.0
      %201 = vmatprep.subr.mxu0 0.0
      %202 = vmatpush2.msra.mxu0 0.0
      %203 = vmatprep.subr.mxu0 0.0
      %204 = vmatpush2.msra.mxu0 0.0
      %205 = vmatprep.subr.mxu0 0.0
      %206 = vmatpush2.msra.mxu0 0.0
      %207 = vmatprep.subr.mxu0 0.0
      %208 = vmatpush2.msra.mxu0 0.0
      %209 = vmatprep.subr.mxu0 0.0
      %210 = vmatpush2.msra.mxu0 0.0
      %211 = vmatprep.subr.mxu0 0.0
      %212 = vmatpush2.msra.mxu0 0.0
      %213 = vmatprep.subr.mxu0 0.0
      %214 = vmatpush2.msra.mxu0 0.0
      %215 = vmatprep.subr.mxu0 0.0
      %216 = vmatpush2.msra.mxu0 0.0
      %217 = vmatprep.mubr.f32.mxu0 0.0
      %218 = vmatmul.mubr.f32.gmra.mxu0 %v151
      %v219 = vpop.f32.mrf.mxu0
      %v220 = vadd.f32 0.0, %v219
      %v221 = vpop.f32.mrf.mxu0
      %222 = vdwg.mxu0
      %vm223 = vcmask 48128
      %224 = vst.msk [vmem:[#allocation8] sm:$0xff] %vm223, %v220
    $region25: #{tpu_custom_call.1} parent=1 // pred_fallthru
      _
    // Predicated region
    $region26: #{tpu_custom_call.1} parent=1 // pred_check
      _
    $region27: #{tpu_custom_call.1} parent=1 // pred_check_branch
      %226 = sbr.rel (0) target = $region29
    $region28: #{tpu_custom_call.1} parent=1 // pred_region
      %s228 = ssub.s32 128, 128
      %229 = vsyncadd [#allocation5], %s228
      %s231 = sshll.u32 [#allocation8], 4
      %s232 = int_to_ptr.vmem [resolvable:$true] %s231
      %234 = dma.vmem_to_hbm [thread:$0]  %s232, 128, %s2, [#allocation5]
    $region29: #{tpu_custom_call.1} parent=1 // pred_fallthru
      _
    // Predicated region
    $region30: #{tpu_custom_call.1} parent=1 // pred_check
      _
    $region31: #{tpu_custom_call.1} parent=1 // pred_check_branch
      %236 = sbr.rel (0) target = $region33
    $region32: #{tpu_custom_call.1} parent=1 // pred_region
      %237 = dma.done [#allocation5], 128
    $region33: #{tpu_custom_call.1} parent=1 // pred_fallthru
      _
    %238 = vsyncpa [#allocation4], 1
    %239 = vsyncpa [#allocation7], 1
    %240 = vsyncpa [#allocation5], 1

</llo_original>
